<compile_context>
chip_gen: v5e
topology: v5e:2x2
jax: 0.10.0
libtpu: 0.0.40
codegen_flags: <defaults>
</compile_context>

<pallas_src>
import jax
import jax.numpy as jnp
from jax import lax
from jax.experimental import pallas as pl
from jax.experimental.pallas import tpu as pltpu

FRAME_RATE = 25.0


def _round_up(x, m):
    return (x + m - 1) // m * m


def _make_kernel(d, td, tb, multi_d):
    """Build the kernel body with all tiling facts closed over statically."""
    if multi_d:
        # td is a multiple of 128; reduction over the feature axis is done as
        # pure VPU adds of 128-lane chunks into the resident (tb, 128) output.
        n_chunks = td // 128
        ragged = (d % td) != 0

        def kernel(yt_ref, yp_ref, out_ref):
            j = pl.program_id(1)

            @pl.when(j == 0)
            def _init():
                out_ref[...] = jnp.zeros_like(out_ref)

            if ragged:
                limit = d - j * td  # valid lanes in this d-tile (>= td except last)
                lane0 = lax.broadcasted_iota(jnp.int32, (tb, 128), 1)

            part = None
            for c in range(n_chunks):
                lo = c * 128
                chunk = (yt_ref[:, lo:lo + 128].astype(jnp.float32) *
                         yp_ref[:, lo:lo + 128].astype(jnp.float32))
                if ragged:
                    chunk = jnp.where((lane0 + lo) < limit, chunk, 0.0)
                part = chunk if part is None else part + chunk
            out_ref[...] += part

        return kernel

    # d < 128: single full-width feature tile, one cross-lane reduce per row tile.
    def kernel_small(yt_ref, yp_ref, out_ref):
        prod = yt_ref[...].astype(jnp.float32) * yp_ref[...].astype(jnp.float32)
        out_ref[...] = jnp.sum(prod, axis=-1, keepdims=True)

    return kernel_small


def custom_loss(y_pred, y_true, tta, frame_rate=FRAME_RATE, *,
                tb_cap=256, vmem_budget_bytes=24 << 20):
    """Pallas equivalent of CustomLoss(frame_rate)(y_pred, y_true, tta)."""
    b = y_pred.shape[0]
    yp = y_pred.reshape(b, -1)   # native dtype, no padding / no extra HBM pass
    yt = y_true.reshape(b, -1)
    d = yp.shape[1]
    assert yt.shape == (b, d), "y_pred / y_true shape mismatch"

    in_bytes = yp.dtype.itemsize + yt.dtype.itemsize
    min_item = max(1, min(4, min(yp.dtype.itemsize, yt.dtype.itemsize)))
    sub = 8 * (4 // min_item)          # sublane packing: 8 (f32) / 16 (bf16) / 32 (int8)

    # --- Row tile: dtype-aware alignment; >=2 row tiles when rows allow (megacore). ---
    if b > tb_cap:
        tb = max(sub, (tb_cap // sub) * sub)
    elif b >= 2 * sub:
        tb = _round_up(-(-b // 2), sub)   # ~half the rows, aligned -> 2 (ragged) row tiles
    else:
        tb = b                            # single full-dim row tile (always legal)

    # --- Feature tile: as wide as the double-buffered VMEM budget allows. ---
    td_fit = max(128, vmem_budget_bytes // (2 * tb * in_bytes))
    if d >= 128:
        td = (min(d, td_fit) // 128) * 128
        multi_d = True
    else:
        td = d
        multi_d = False

    grid = (pl.cdiv(b, tb), pl.cdiv(d, td))
    out_w = 128 if multi_d else 1

    # VMEM limit derived from the actual working set (+ slack), capped for v7x.
    working = 2 * tb * td * in_bytes + 2 * tb * out_w * 4
    vmem_limit = int(min(max(working + (4 << 20), 16 << 20), 40 << 20))

    kernel = _make_kernel(d, td, tb, multi_d)

    out = pl.pallas_call(
        kernel,
        out_shape=jax.ShapeDtypeStruct((b, out_w), jnp.float32),
        grid_spec=pltpu.PrefetchScalarGridSpec(
            num_scalar_prefetch=0,
            grid=grid,
            in_specs=[
                pl.BlockSpec((tb, td), lambda i, j: (i, j)),   # y_true
                pl.BlockSpec((tb, td), lambda i, j: (i, j)),   # y_pred
            ],
            # Output block resident across the (last, "arbitrary") reduction axis.
            out_specs=pl.BlockSpec((tb, out_w), lambda i, j: (i, 0)),
        ),
        compiler_params=pltpu.CompilerParams(
            dimension_semantics=("parallel", "arbitrary"),
            vmem_limit_bytes=vmem_limit,
        ),
    )(yt, yp)

    # Tiny epilogue in plain JAX: 128->1 reduce, per-row weight, mean over batch.
    w = jnp.exp(
        jnp.maximum(
            jnp.float32(0.0),
            tta.reshape(b).astype(jnp.float32) / jnp.float32(frame_rate),
        )
    )
    per_row = jnp.sum(out, axis=-1)        # (b,)
    return jnp.sum(per_row * w) / jnp.float32(b)


def _reference_loss(y_pred, y_true, tta, frame_rate=FRAME_RATE):
    b = y_pred.shape[0]
    yp = y_pred.reshape(b, -1).astype(jnp.float32)
    yt = y_true.reshape(b, -1).astype(jnp.float32)
    t = tta.reshape(b).astype(jnp.float32) / jnp.float32(frame_rate)
    w = jnp.exp(jnp.maximum(0.0, t))
    return jnp.sum(w * jnp.sum(yt * yp, axis=-1)) / b


if __name__ == "__main__":
    key = jax.random.PRNGKey(0)
    ks = jax.random.split(key, 12)

    def run_case(idx, shape, dtype, tol):
        k1, k2, k3 = ks[3 * idx], ks[3 * idx + 1], ks[3 * idx + 2]
        yp = jax.random.normal(k1, shape, dtype=jnp.float32).astype(dtype)
        yt = jax.random.normal(k2, shape, dtype=jnp.float32).astype(dtype)
        tta = jax.random.uniform(k3, (shape[0],), dtype=jnp.float32,
                                 minval=-10.0, maxval=50.0)
        got = jax.block_until_ready(custom_loss(yp, yt, tta))
        ref = _reference_loss(yp, yt, tta)
        assert jnp.allclose(got, ref, rtol=tol, atol=tol), (shape, dtype, got, ref)

    # 1. Module-like small input (batch=2, channels=4, width=16), f32,
    #    single full-width feature tile (d=64 < 128).
    run_case(0, (2, 4, 16), jnp.float32, 1e-4)
    # 2. bf16, d=300: native-dtype DMA, 128-chunk accumulation, ragged last
    #    feature tile (44 valid lanes), 2 aligned (16-row) row tiles.
    run_case(1, (32, 300), jnp.bfloat16, 1e-2)
    # 3. f32, b=20, d=700: ragged row tiles (16 + 4) AND ragged feature tile.
    run_case(2, (20, 700), jnp.float32, 1e-4)
    # 4. f32, b=16, d=512: fully aligned multi-chunk path, no masking.
    run_case(3, (16, 512), jnp.float32, 1e-4)

    print("KERNEL_OK")
</pallas_src>

<mosaic_0001>
module attributes {stable_mosaic.version = 11 : i64} {
  func.func @kernel_small(%arg0: i32, %arg1: i32, %arg2: memref<2x64xf32, #tpu.memory_space<vmem>>, %arg3: memref<2x64xf32, #tpu.memory_space<vmem>>, %arg4: memref<2x1xf32, #tpu.memory_space<vmem>>) attributes {dimension_semantics = [#tpu.dimension_semantics<parallel>, #tpu.dimension_semantics<arbitrary>], iteration_bounds = array<i64: 1, 1>, scalar_prefetch = 0 : i64, scratch_operands = 0 : i64, tpu.core_type = #tpu.core_type<tc>, window_params = [{transform_indices = @transform_0, window_bounds = array<i64: 2, 64>}, {transform_indices = @transform_1, window_bounds = array<i64: 2, 64>}, {transform_indices = @transform_2, window_bounds = array<i64: 2, 1>}]} {
    %c0 = arith.constant 0 : index
    %c0_0 = arith.constant 0 : index
    %0 = vector.load %arg2[%c0, %c0_0] : memref<2x64xf32, #tpu.memory_space<vmem>>, vector<2x64xf32>
    %c0_1 = arith.constant 0 : index
    %c0_2 = arith.constant 0 : index
    %1 = vector.load %arg3[%c0_1, %c0_2] : memref<2x64xf32, #tpu.memory_space<vmem>>, vector<2x64xf32>
    %2 = arith.mulf %0, %1 : vector<2x64xf32>
    %cst = arith.constant dense<0.000000e+00> : vector<2xf32>
    %3 = vector.multi_reduction <add>, %2, %cst [1] : vector<2x64xf32> to vector<2xf32>
    %4 = vector.shape_cast %3 : vector<2xf32> to vector<2x1xf32>
    %c0_3 = arith.constant 0 : index
    %c0_4 = arith.constant 0 : index
    %5 = vector.load %arg4[%c0_3, %c0_4] : memref<2x1xf32, #tpu.memory_space<vmem>>, vector<2x1xf32>
    tpu.vector_store %arg4[%c0_3, %c0_4], %4 {strides = array<i32>} : memref<2x1xf32, #tpu.memory_space<vmem>>, vector<2x1xf32>,
    return
  }
  func.func @transform_0(%arg0: i32, %arg1: i32) -> (i32, i32) {
    %c0_i32 = arith.constant 0 : i32
    return %arg0, %arg1 : i32, i32
  }
  func.func @transform_1(%arg0: i32, %arg1: i32) -> (i32, i32) {
    %c0_i32 = arith.constant 0 : i32
    return %arg0, %arg1 : i32, i32
  }
  func.func @transform_2(%arg0: i32, %arg1: i32) -> (i32, i32) {
    %c0_i32 = arith.constant 0 : i32
    %c0_i32_0 = arith.constant 0 : i32
    return %arg0, %c0_i32 : i32, i32
  }
}

</mosaic_0001>

<llo_original>
// kernel: tpu_custom_call.1
$region0: #{tpu_custom_call.1}
  #allocation0 [shape = 'u32[]', space=smem, size = 0x4, offset = 0x4, fixed_abs, tag = 'smem constant byte address 0x4 - core index']
  #allocation1 [shape = 'u32[72,128]{1,0:T(1,128)}', space=vmem, size = 0x9000, scoped, tag = 'internal scratch']
  %s0 = inlined_call_operand.hbm [shape: f32[2,64], index: 0, kind: input, shape index: {}]
  %s1 = inlined_call_operand.hbm [shape: f32[2,64], index: 1, kind: input, shape index: {}]
  %s2 = inlined_call_operand.vmem [shape: f32[2,1], index: 2, kind: output, shape index: {}]
  %s3 = sld [smem:[#allocation0]]
  $region26: #{tpu_custom_call.1} parent=0
    _
  %s5 = ssub.s32 1, %s3
  %s6 = scalar_select 0, %s5, %s3
  $region1: #{tpu_custom_call.1} parent=0
    #allocation2 [shape = 'u8[1024]{0}', space=vmem, size = 0x400, scoped, tag = 'input window, operand 0, single buffered']
    #allocation3 [shape = 's32[1]{0}', space=sflag, size = 0x4, scoped, tag = 'scoped memory for tpu_custom_call.1']
    #allocation4 [shape = 'u8[1024]{0}', space=vmem, size = 0x400, scoped, tag = 'input window, operand 1, single buffered']
    #allocation5 [shape = 's32[1]{0}', space=sflag, size = 0x4, scoped, tag = 'scoped memory for tpu_custom_call.1']
    %7 = vsyncpa [#allocation3], 0
    %8 = vsyncpa [#allocation5], 0
    // Predicated region
    $region2: #{tpu_custom_call.1} parent=1 // pred_check
      _
    $region3: #{tpu_custom_call.1} parent=1 // pred_check_branch
      %10 = sbr.rel (0) target = $region5
    $region4: #{tpu_custom_call.1} parent=1 // pred_region
      %12 = vsyncadd [#allocation3], 0
      %s14 = sshll.u32 %s0, 4
      %s15 = int_to_ptr.hbm [resolvable:$true] %s14
      %s16 = sshll.u32 [#allocation2], 4
      %s17 = int_to_ptr.vmem [resolvable:$true] %s16
      %19 = dma.hbm_to_vmem [thread:$0]  %s15, 32, %s17, [#allocation3]
    $region5: #{tpu_custom_call.1} parent=1 // pred_fallthru
      _
    // Predicated region
    $region6: #{tpu_custom_call.1} parent=1 // pred_check
      _
    $region7: #{tpu_custom_call.1} parent=1 // pred_check_branch
      %21 = sbr.rel (0) target = $region9
    $region8: #{tpu_custom_call.1} parent=1 // pred_region
      %23 = vsyncadd [#allocation5], 0
      %s25 = sshll.u32 %s1, 4
      %s26 = int_to_ptr.hbm [resolvable:$true] %s25
      %s27 = sshll.u32 [#allocation4], 4
      %s28 = int_to_ptr.vmem [resolvable:$true] %s27
      %30 = dma.hbm_to_vmem [thread:$0]  %s26, 32, %s28, [#allocation5]
    $region9: #{tpu_custom_call.1} parent=1 // pred_fallthru
      _
    // Predicated region
    $region10: #{tpu_custom_call.1} parent=1 // pred_check
      _
    $region11: #{tpu_custom_call.1} parent=1 // pred_check_branch
      %32 = sbr.rel (0) target = $region13
    $region12: #{tpu_custom_call.1} parent=1 // pred_region
      %34 = dma.done [#allocation3], 32
    $region13: #{tpu_custom_call.1} parent=1 // pred_fallthru
      _
    // Predicated region
    $region14: #{tpu_custom_call.1} parent=1 // pred_check
      _
    $region15: #{tpu_custom_call.1} parent=1 // pred_check_branch
      %36 = sbr.rel (0) target = $region17
    $region16: #{tpu_custom_call.1} parent=1 // pred_region
      %38 = dma.done [#allocation5], 32
    $region17: #{tpu_custom_call.1} parent=1 // pred_fallthru
      _
    %v39 = vld [vmem:[#allocation2] sm:$0x3]
    %v40 = vld [vmem:[#allocation4] sm:$0x3]
    %v41 = vmul.f32 %v39, %v40
    %vm42 = vcmask 517120
    %v43 = vsel %vm42, %v41, 0.0
    %44 = vadd.xlane.f32.xlu0 %v43
    %v45 = vpop.xlane.xlu0 %44
    %vm46 = vcmask 1024
    %47 = vst.msk [vmem:[%s2] sm:$0x3] %vm46, %v45
    // Predicated region
    $region18: #{tpu_custom_call.1} parent=1 // pred_check
      _
    $region19: #{tpu_custom_call.1} parent=1 // pred_check_branch
      %49 = sbr.rel (0) target = $region21
    $region20: #{tpu_custom_call.1} parent=1 // pred_region
      _
    $region21: #{tpu_custom_call.1} parent=1 // pred_fallthru
      _
    // Predicated region
    $region22: #{tpu_custom_call.1} parent=1 // pred_check
      _
    $region23: #{tpu_custom_call.1} parent=1 // pred_check_branch
      %51 = sbr.rel (0) target = $region25
    $region24: #{tpu_custom_call.1} parent=1 // pred_region
      _
    $region25: #{tpu_custom_call.1} parent=1 // pred_fallthru
      _
    %52 = vsyncpa [#allocation3], 1
    %53 = vsyncpa [#allocation5], 1

</llo_original>
